<compile_context>
chip_gen: v7x
topology: tpu7x:2x2x1
jax: 0.10.0
libtpu: 0.0.40
codegen_flags: <defaults>
</compile_context>

<pallas_src>
import functools

import jax
import jax.numpy as jnp
import numpy as np
from jax.experimental import pallas as pl
from jax.experimental.pallas import tpu as pltpu


def _round_up(x, m):
    return (x + m - 1) // m * m


def _vmem_capacity_bytes():
    try:
        return int(pltpu.get_tpu_info().vmem_capacity_bytes)
    except Exception:
        return 64 * 1024 * 1024          # conservative (v7x-sized) fallback


def _default_tanh_dtype():
    """bf16 tanh on chips with a bf16 EUP (v6e/v7x); f32 on older chips."""
    try:
        kind = jax.devices()[0].device_kind.lower()
    except Exception:
        kind = ""
    old = ("v2", "v3", "v4", "v5 lite", "v5e", "v5lite")
    if any(tag in kind for tag in old):
        return jnp.float32
    return jnp.bfloat16


def _pick_batch_tile(B, S, E2, Hp, enc_itemsize, tanh_itemsize):
    """Pick (TB, Bp): batch tile and (possibly padded) batch extent.

    Budgets the full per-tile VMEM working set -- double-buffered encoder
    block, the two f32 (S,TB,Hp) intermediates, the tanh energy tensor, the
    resident W_e block and the small hidden/mask/out buffers -- against the
    actual chip VMEM capacity, leaving ~60% headroom.
    """
    vmem = _vmem_capacity_bytes()
    budget = int(vmem * 0.40)

    pack = 32 // enc_itemsize            # sublane pack: 8 (f32) / 16 (bf16)
    per_tb = (2 * S * E2 * enc_itemsize  # encoder double buffer
              + S * Hp * 4               # f32 enc_proj (MXU output)
              + S * Hp * 4               # f32 pre-activation sum
              + S * Hp * tanh_itemsize   # tanh energy tensor
              + 2 * Hp * 4               # hidden-proj input (double buffered)
              + 4 * S * 4)               # mask + out double buffers
    fixed = 2 * E2 * Hp * enc_itemsize + 2 * Hp * 4
    tb_budget = max((budget - fixed) // per_tb, 1)

    bp_full = _round_up(B, pack)
    if tb_budget >= bp_full or bp_full <= 128:
        if B >= 256:
            # Split into >=2 lane-aligned tiles so v7x's two TensorCores both
            # get work; partial last tile is handled by Pallas (OOB writes
            # dropped, columns are independent).
            return _round_up(-(-B // 2), 128), B
        # Whole batch in one tile, padded to the sublane pack so the in-kernel
        # reshape is layout preserving.
        return bp_full, bp_full
    # Budget-limited: lane-aligned batch tiles, partial last tile allowed.
    # TODO(synk): if even TB=128 overflows VMEM (huge S*Hp), chunk the seq
    # axis inside the kernel with an online softmax instead.
    tb = max((tb_budget // 128) * 128, 128)
    return tb, B


def attention_kernel(hidb_ref, enc_ref, mask_ref, we_ref, v_ref, out_ref, *,
                     tanh_dtype):
    # hidb_ref: (TB, Hp)     f32   hidden @ W_h^T + b (precomputed in wrapper)
    # enc_ref:  (S, TB, E2)  compute dtype, seq-major
    # mask_ref: (S, TB)      int32 (0 == pad)
    # we_ref:   (E2, Hp)     compute dtype, encoder slice of attn.weight^T
    # v_ref:    (1, Hp)      f32   v weight (zero-padded lanes)
    # out_ref:  (S, TB)      f32   softmax attention weights
    s, tb, e2 = enc_ref.shape
    hp = we_ref.shape[1]

    # One flattened MXU call (full M dimension), f32 accumulation.
    enc2d = enc_ref[...].reshape(s * tb, e2)
    enc_proj = jnp.dot(enc2d, we_ref[...],
                       preferred_element_type=jnp.float32).reshape(s, tb, hp)

    # Single broadcast add: hidden projection + bias were folded in the wrapper.
    pre = enc_proj + hidb_ref[...][None, :, :]

    # tanh on the EUP; bf16 on v6e/v7x (~2x EUP throughput), f32 on v5e.
    energy = jnp.tanh(pre.astype(tanh_dtype))                         # (S, TB, Hp)
    v = v_ref[...].astype(tanh_dtype)
    scores = jnp.sum((energy * v[None, :, :]).astype(jnp.float32),
                     axis=-1)                                         # (S, TB)

    scores = jnp.where(mask_ref[...] == 0, jnp.float32(-1e10), scores)

    # Softmax over src_len (axis 0 in the seq-major layout), all f32.
    m = jnp.max(scores, axis=0, keepdims=True)
    e = jnp.exp(scores - m)
    denom = jnp.sum(e, axis=0, keepdims=True)
    inv = pl.reciprocal(denom, approx=True)                           # EUP slot
    out_ref[...] = (e * inv).astype(out_ref.dtype)


def attention_forward(hidden, encoder_outputs, mask, params,
                      compute_dtype=jnp.bfloat16, tanh_dtype=None,
                      batch_tile=None):
    S, B, E2 = encoder_outputs.shape
    H = hidden.shape[1]
    Hp = _round_up(H, 128)               # lane / MXU-width aligned projection dim
    pad = Hp - H

    if tanh_dtype is None:
        tanh_dtype = _default_tanh_dtype()

    # attn.weight: (H, H + E2); input order is cat(hidden, encoder_outputs).
    W = params["attn_w"]
    wh_t = jnp.transpose(W[:, :H])                       # (H, H)
    we_t = jnp.transpose(W[:, H:])                       # (E2, H)
    b_row = params["attn_b"].reshape(1, H)
    v_row = params["v_w"].reshape(1, H)
    if pad:
        wh_t = jnp.pad(wh_t, ((0, 0), (0, pad)))
        we_t = jnp.pad(we_t, ((0, 0), (0, pad)))
        b_row = jnp.pad(b_row, ((0, 0), (0, pad)))
        v_row = jnp.pad(v_row, ((0, 0), (0, pad)))

    # Fold hidden @ W_h + b into one tiny (B,H)@(H,Hp) XLA matmul; the kernel
    # then only adds one broadcast term (padded lanes are exactly 0).
    hid_proj = (hidden.astype(jnp.float32) @ wh_t.astype(jnp.float32)
                + b_row.astype(jnp.float32))             # (B, Hp) f32

    enc = encoder_outputs.astype(compute_dtype)          # stays seq-major
    we_t = we_t.astype(compute_dtype)
    v_row = v_row.astype(jnp.float32)
    mask_sm = jnp.transpose(mask.astype(jnp.int32))      # (S, B) -- tiny

    enc_itemsize = jnp.dtype(compute_dtype).itemsize
    tanh_itemsize = jnp.dtype(tanh_dtype).itemsize
    if batch_tile is None:
        TB, Bp = _pick_batch_tile(B, S, E2, Hp, enc_itemsize, tanh_itemsize)
    else:
        TB, Bp = int(batch_tile), B

    if Bp > B:
        # Pad batch to the sublane pack so the in-kernel (S,TB,E2)->(S*TB,E2)
        # reshape is layout preserving (no Mosaic relayout copies).
        enc = jnp.pad(enc, ((0, 0), (0, Bp - B), (0, 0)))
        hid_proj = jnp.pad(hid_proj, ((0, Bp - B), (0, 0)))
        mask_sm = jnp.pad(mask_sm, ((0, 0), (0, Bp - B)))

    grid = (pl.cdiv(Bp, TB),)
    vmem_cap = _vmem_capacity_bytes()

    cost = pl.CostEstimate(
        flops=int(2 * Bp * S * E2 * Hp + 8 * Bp * S * Hp),
        transcendentals=int(Bp * S * Hp + 2 * Bp * S),
        bytes_accessed=int(S * Bp * E2 * enc_itemsize + Bp * Hp * 4
                           + E2 * Hp * enc_itemsize + Hp * 4
                           + 2 * S * Bp * 4),
    )

    kernel = functools.partial(attention_kernel, tanh_dtype=tanh_dtype)

    out_sm = pl.pallas_call(
        kernel,
        out_shape=jax.ShapeDtypeStruct((S, Bp), jnp.float32),
        grid=grid,
        in_specs=[
            pl.BlockSpec((TB, Hp), lambda i: (i, 0)),            # hidden proj + bias
            pl.BlockSpec((S, TB, E2), lambda i: (0, i, 0)),      # encoder outputs
            pl.BlockSpec((S, TB), lambda i: (0, i)),             # mask
            pl.BlockSpec((E2, Hp), lambda i: (0, 0)),            # W_e (resident)
            pl.BlockSpec((1, Hp), lambda i: (0, 0)),             # v
        ],
        out_specs=pl.BlockSpec((S, TB), lambda i: (0, i)),
        compiler_params=pltpu.CompilerParams(
            dimension_semantics=("parallel",),                   # 2 TCs on v7x
            vmem_limit_bytes=int(vmem_cap * 0.7),
        ),
        cost_estimate=cost,
    )(hid_proj, enc, mask_sm, we_t, v_row)

    # (S, Bp) -> (B, S): negligible traffic vs. the encoder tensor.
    return jnp.transpose(out_sm)[:B]


def attention_reference(hidden, encoder_outputs, mask, params):
    """Pure-JAX transcription of the PyTorch forward, for checking."""
    S, B, _ = encoder_outputs.shape
    hid_rep = jnp.repeat(hidden[:, None, :], S, axis=1)      # (B, S, H)
    enc = jnp.transpose(encoder_outputs, (1, 0, 2))          # (B, S, E2)
    cat = jnp.concatenate([hid_rep, enc], axis=2)            # (B, S, H+E2)
    energy = jnp.tanh(cat @ params["attn_w"].T + params["attn_b"])
    attention = (energy @ params["v_w"].T)[..., 0]           # (B, S)
    attention = jnp.where(mask == 0, -1e10, attention)
    return jax.nn.softmax(attention, axis=1)


def init_params(key, enc_hid_dim, dec_hid_dim):
    """Deterministic init matching PyTorch nn.Linear default shapes/bounds."""
    k1, k2, k3 = jax.random.split(key, 3)
    in_f = enc_hid_dim * 2 + dec_hid_dim
    b1 = 1.0 / np.sqrt(in_f)
    attn_w = jax.random.uniform(k1, (dec_hid_dim, in_f), jnp.float32, -b1, b1)
    attn_b = jax.random.uniform(k2, (dec_hid_dim,), jnp.float32, -b1, b1)
    b2 = 1.0 / np.sqrt(dec_hid_dim)
    v_w = jax.random.uniform(k3, (1, dec_hid_dim), jnp.float32, -b2, b2)
    return {"attn_w": attn_w, "attn_b": attn_b, "v_w": v_w}


if __name__ == "__main__":
    key = jax.random.PRNGKey(0)
    B, S, ENC_HID, DEC_HID = 2, 8, 16, 32
    kp, kh, ke = jax.random.split(key, 3)

    params = init_params(kp, ENC_HID, DEC_HID)
    hidden = jax.random.normal(kh, (B, DEC_HID), jnp.float32)
    encoder_outputs = jax.random.normal(ke, (S, B, 2 * ENC_HID), jnp.float32)
    lengths = jnp.array([8, 5], dtype=jnp.int32)
    mask = (jnp.arange(S)[None, :] < lengths[:, None]).astype(jnp.int32)  # (B, S)

    ref = attention_reference(hidden, encoder_outputs, mask, params)

    # f32 path: tight check (approx reciprocal is the only deviation).
    out_f32 = jax.block_until_ready(
        attention_forward(hidden, encoder_outputs, mask, params,
                          compute_dtype=jnp.float32, tanh_dtype=jnp.float32))
    np.testing.assert_allclose(np.asarray(out_f32), np.asarray(ref),
                               rtol=2e-3, atol=2e-3)

    # Fast path (default): bf16 MXU inputs, bf16 tanh on v6e/v7x, f32 accum.
    out_fast = jax.block_until_ready(
        attention_forward(hidden, encoder_outputs, mask, params))
    np.testing.assert_allclose(np.asarray(out_fast), np.asarray(ref),
                               rtol=5e-2, atol=2e-2)

    # Multi-tile / partial-last-tile / megacore-split path (B >= 256, B not
    # divisible by the 128-aligned batch tile).
    B2, S2 = 300, 16
    kh2, ke2, kl2 = jax.random.split(jax.random.PRNGKey(1), 3)
    hidden2 = jax.random.normal(kh2, (B2, DEC_HID), jnp.float32)
    enc2 = jax.random.normal(ke2, (S2, B2, 2 * ENC_HID), jnp.float32)
    lengths2 = jax.random.randint(kl2, (B2,), 1, S2 + 1)
    mask2 = (jnp.arange(S2)[None, :] < lengths2[:, None]).astype(jnp.int32)
    ref2 = attention_reference(hidden2, enc2, mask2, params)
    out2 = jax.block_until_ready(attention_forward(hidden2, enc2, mask2, params))
    assert not np.any(np.isnan(np.asarray(out2))), "NaN leaked into valid columns"
    np.testing.assert_allclose(np.asarray(out2), np.asarray(ref2),
                               rtol=5e-2, atol=2e-2)

    print("KERNEL_OK")
</pallas_src>

<mosaic_0001>
module attributes {stable_mosaic.version = 11 : i64} {
  func.func @attention_kernel(%arg0: i32, %arg1: memref<8x128xf32, #tpu.memory_space<vmem>>, %arg2: memref<8x8x32xf32, #tpu.memory_space<vmem>>, %arg3: memref<8x8xi32, #tpu.memory_space<vmem>>, %arg4: memref<32x128xf32, #tpu.memory_space<vmem>>, %arg5: memref<1x128xf32, #tpu.memory_space<vmem>>, %arg6: memref<8x8xf32, #tpu.memory_space<vmem>>) attributes {dimension_semantics = [#tpu.dimension_semantics<parallel>], iteration_bounds = array<i64: 1>, scalar_prefetch = 0 : i64, scratch_operands = 0 : i64, tpu.core_type = #tpu.core_type<tc>, window_params = [{transform_indices = @transform_0, window_bounds = array<i64: 8, 128>}, {transform_indices = @transform_1, window_bounds = array<i64: 8, 8, 32>}, {transform_indices = @transform_2, window_bounds = array<i64: 8, 8>}, {pipeline_mode = #tpu.pipeline_mode<synchronous>, transform_indices = @transform_3, window_bounds = array<i64: 32, 128>}, {pipeline_mode = #tpu.pipeline_mode<synchronous>, transform_indices = @transform_4, window_bounds = array<i64: 1, 128>}, {transform_indices = @transform_5, window_bounds = array<i64: 8, 8>}]} {
    %c0 = arith.constant 0 : index
    %c0_0 = arith.constant 0 : index
    %c0_1 = arith.constant 0 : index
    %0 = vector.load %arg2[%c0, %c0_0, %c0_1] : memref<8x8x32xf32, #tpu.memory_space<vmem>>, vector<8x8x32xf32>
    %1 = vector.shape_cast %0 : vector<8x8x32xf32> to vector<64x32xf32>
    %c0_2 = arith.constant 0 : index
    %c0_3 = arith.constant 0 : index
    %2 = vector.load %arg4[%c0_2, %c0_3] : memref<32x128xf32, #tpu.memory_space<vmem>>, vector<32x128xf32>
    %cst = arith.constant dense<0.000000e+00> : vector<64x128xf32>
    %3 = tpu.matmul %1, %2, %cst {dimension_numbers = #tpu.dot_dimension_numbers<[1], [0], [0], [1], [0, 0, 1, 1], [], []>} : vector<64x32xf32>, vector<32x128xf32>, vector<64x128xf32> -> vector<64x128xf32>
    %4 = vector.shape_cast %3 : vector<64x128xf32> to vector<8x8x128xf32>
    %c0_4 = arith.constant 0 : index
    %c0_5 = arith.constant 0 : index
    %5 = vector.load %arg1[%c0_4, %c0_5] : memref<8x128xf32, #tpu.memory_space<vmem>>, vector<8x128xf32>
    %6 = vector.shape_cast %5 : vector<8x128xf32> to vector<1x8x128xf32>
    %7 = vector.broadcast %6 : vector<1x8x128xf32> to vector<8x8x128xf32>
    %8 = arith.addf %4, %7 : vector<8x8x128xf32>
    %9 = math.tanh %8 : vector<8x8x128xf32>
    %c0_6 = arith.constant 0 : index
    %c0_7 = arith.constant 0 : index
    %10 = vector.load %arg5[%c0_6, %c0_7] : memref<1x128xf32, #tpu.memory_space<vmem>>, vector<1x128xf32>
    %11 = vector.shape_cast %10 : vector<1x128xf32> to vector<1x1x128xf32>
    %12 = vector.broadcast %11 : vector<1x1x128xf32> to vector<8x8x128xf32>
    %13 = arith.mulf %9, %12 : vector<8x8x128xf32>
    %cst_8 = arith.constant dense<0.000000e+00> : vector<8x8xf32>
    %14 = vector.multi_reduction <add>, %13, %cst_8 [2] : vector<8x8x128xf32> to vector<8x8xf32>
    %c0_9 = arith.constant 0 : index
    %c0_10 = arith.constant 0 : index
    %15 = vector.load %arg3[%c0_9, %c0_10] : memref<8x8xi32, #tpu.memory_space<vmem>>, vector<8x8xi32>
    %c0_i32 = arith.constant 0 : i32
    %16 = vector.broadcast %c0_i32 : i32 to vector<8x8xi32>
    %17 = arith.cmpi eq, %15, %16 : vector<8x8xi32>
    %cst_11 = arith.constant -1.000000e+10 : f32
    %18 = vector.broadcast %cst_11 : f32 to vector<8x8xf32>
    %19 = arith.select %17, %18, %14 : vector<8x8xi1>, vector<8x8xf32>
    %cst_12 = arith.constant dense<0xFF800000> : vector<8xf32>
    %20 = vector.multi_reduction <maximumf>, %19, %cst_12 [0] : vector<8x8xf32> to vector<8xf32>
    %21 = vector.shape_cast %20 : vector<8xf32> to vector<1x8xf32>
    %22 = vector.broadcast %21 : vector<1x8xf32> to vector<8x8xf32>
    %23 = arith.subf %19, %22 : vector<8x8xf32>
    %24 = math.exp %23 : vector<8x8xf32>
    %cst_13 = arith.constant dense<0.000000e+00> : vector<8xf32>
    %25 = vector.multi_reduction <add>, %24, %cst_13 [0] : vector<8x8xf32> to vector<8xf32>
    %26 = vector.shape_cast %25 : vector<8xf32> to vector<1x8xf32>
    %27 = tpu.reciprocal %26 {approx = true} : vector<1x8xf32> -> vector<1x8xf32>
    %28 = vector.broadcast %27 : vector<1x8xf32> to vector<8x8xf32>
    %29 = arith.mulf %24, %28 : vector<8x8xf32>
    %c0_14 = arith.constant 0 : index
    %c0_15 = arith.constant 0 : index
    %30 = vector.load %arg6[%c0_14, %c0_15] : memref<8x8xf32, #tpu.memory_space<vmem>>, vector<8x8xf32>
    tpu.vector_store %arg6[%c0_14, %c0_15], %29 {strides = array<i32>} : memref<8x8xf32, #tpu.memory_space<vmem>>, vector<8x8xf32>,
    return
  }
  func.func @transform_0(%arg0: i32) -> (i32, i32) {
    %c0_i32 = arith.constant 0 : i32
    %c0_i32_0 = arith.constant 0 : i32
    return %arg0, %c0_i32 : i32, i32
  }
  func.func @transform_1(%arg0: i32) -> (i32, i32, i32) {
    %c0_i32 = arith.constant 0 : i32
    %c0_i32_0 = arith.constant 0 : i32
    %c0_i32_1 = arith.constant 0 : i32
    return %c0_i32, %arg0, %c0_i32_0 : i32, i32, i32
  }
  func.func @transform_2(%arg0: i32) -> (i32, i32) {
    %c0_i32 = arith.constant 0 : i32
    %c0_i32_0 = arith.constant 0 : i32
    return %c0_i32, %arg0 : i32, i32
  }
  func.func @transform_3(%arg0: i32) -> (i32, i32) {
    %c0_i32 = arith.constant 0 : i32
    %c0_i32_0 = arith.constant 0 : i32
    %c0_i32_1 = arith.constant 0 : i32
    return %c0_i32, %c0_i32_0 : i32, i32
  }
  func.func @transform_4(%arg0: i32) -> (i32, i32) {
    %c0_i32 = arith.constant 0 : i32
    %c0_i32_0 = arith.constant 0 : i32
    %c0_i32_1 = arith.constant 0 : i32
    return %c0_i32, %c0_i32_0 : i32, i32
  }
  func.func @transform_5(%arg0: i32) -> (i32, i32) {
    %c0_i32 = arith.constant 0 : i32
    %c0_i32_0 = arith.constant 0 : i32
    return %c0_i32, %arg0 : i32, i32
  }
}

</mosaic_0001>

<llo_original>
// kernel: tpu_custom_call.1
$region0: #{tpu_custom_call.1}
  #allocation0 [shape = 'u32[]', space=smem, size = 0x4, offset = 0x4, fixed_abs, tag = 'smem constant byte address 0x4 - core index']
  #allocation1 [shape = 'u32[144,128]{1,0:T(1,128)}', space=vmem, size = 0x12000, scoped, tag = 'internal scratch']
  %s0 = inlined_call_operand.hbm [shape: f32[8,128], index: 0, kind: input, shape index: {}]
  %s1 = inlined_call_operand.hbm [shape: f32[8,8,32], index: 1, kind: input, shape index: {}]
  %s2 = inlined_call_operand.hbm [shape: s32[8,8], index: 2, kind: input, shape index: {}]
  %s3 = inlined_call_operand.hbm [shape: f32[32,128], index: 3, kind: input, shape index: {}]
  %s4 = inlined_call_operand.vmem [shape: f32[1,128], index: 4, kind: input, shape index: {}]
  %s5 = inlined_call_operand.hbm [shape: f32[8,8], index: 5, kind: output, shape index: {}]
  %s6 = sld [smem:[#allocation0]]
  $region46: #{tpu_custom_call.1} parent=0
    _
  %s8 = ssub.s32 1, %s6
  %s9 = scalar_select 0, %s8, %s6
  $region1: #{tpu_custom_call.1} parent=0
    #allocation2 [shape = 'u8[4096]{0}', space=vmem, size = 0x1000, scoped, tag = 'input window, operand 0, single buffered']
    #allocation3 [shape = 's32[1]{0}', space=sflag, size = 0x4, scoped, tag = 'scoped memory for tpu_custom_call.1']
    #allocation4 [shape = 's32[1]{0}', space=sflag, size = 0x4, scoped, tag = 'scoped memory for tpu_custom_call.1']
    #allocation5 [shape = 'u8[32768]{0}', space=vmem, size = 0x8000, scoped, tag = 'input window, operand 1, single buffered']
    #allocation6 [shape = 's32[1]{0}', space=sflag, size = 0x4, scoped, tag = 'scoped memory for tpu_custom_call.1']
    #allocation7 [shape = 'u8[4096]{0}', space=vmem, size = 0x1000, scoped, tag = 'input window, operand 2, single buffered']
    #allocation8 [shape = 'u8[16384]{0}', space=vmem, size = 0x4000, scoped, tag = 'input window, operand 3, single buffered']
    #allocation9 [shape = 's32[1]{0}', space=sflag, size = 0x4, scoped, tag = 'scoped memory for tpu_custom_call.1']
    #allocation10 [shape = 'u8[4096]{0}', space=vmem, size = 0x1000, scoped, tag = 'output window, operand 0, single buffered']
    %10 = vsyncpa [#allocation3], 0
    %11 = vsyncpa [#allocation6], 0
    %12 = vsyncpa [#allocation9], 0
    %13 = vsyncpa [#allocation4], 0
    // Predicated region
    $region2: #{tpu_custom_call.1} parent=1 // pred_check
      _
    $region3: #{tpu_custom_call.1} parent=1 // pred_check_branch
      %15 = sbr.rel (0) target = $region5
    $region4: #{tpu_custom_call.1} parent=1 // pred_region
      %s17 = ssub.s32 128, 128
      %18 = vsyncadd [#allocation3], %s17
      %s20 = sshll.u32 [#allocation2], 4
      %s21 = int_to_ptr.vmem [resolvable:$true] %s20
      %23 = dma.hbm_to_vmem [thread:$0]  %s0, 128, %s21, [#allocation3]
    $region5: #{tpu_custom_call.1} parent=1 // pred_fallthru
      _
    // Predicated region
    $region6: #{tpu_custom_call.1} parent=1 // pred_check
      _
    $region7: #{tpu_custom_call.1} parent=1 // pred_check_branch
      %25 = sbr.rel (0) target = $region9
    $region8: #{tpu_custom_call.1} parent=1 // pred_region
      %s27 = ssub.s32 1024, 1024
      %28 = vsyncadd [#allocation6], %s27
      %s29 = sshll.u32 [#allocation5], 4
      %s30 = int_to_ptr.vmem [resolvable:$true] %s29
      %35 = dma.hbm_to_vmem [thread:$0]  %s1, 1024, %s30, [#allocation6], 128, 128, 8
    $region9: #{tpu_custom_call.1} parent=1 // pred_fallthru
      _
    // Predicated region
    $region10: #{tpu_custom_call.1} parent=1 // pred_check
      _
    $region11: #{tpu_custom_call.1} parent=1 // pred_check_branch
      %37 = sbr.rel (0) target = $region13
    $region12: #{tpu_custom_call.1} parent=1 // pred_region
      %s39 = ssub.s32 128, 128
      %40 = vsyncadd [#allocation6], %s39
      %s42 = sshll.u32 [#allocation7], 4
      %s43 = int_to_ptr.vmem [resolvable:$true] %s42
      %45 = dma.hbm_to_vmem [thread:$0]  %s2, 128, %s43, [#allocation6]
    $region13: #{tpu_custom_call.1} parent=1 // pred_fallthru
      _
    // Predicated region
    $region14: #{tpu_custom_call.1} parent=1 // pred_check
      _
    $region15: #{tpu_custom_call.1} parent=1 // pred_check_branch
      %47 = sbr.rel (0) target = $region17
    $region16: #{tpu_custom_call.1} parent=1 // pred_region
      %s49 = ssub.s32 512, 512
      %50 = vsyncadd [#allocation9], %s49
      %s51 = sshll.u32 [#allocation8], 4
      %s52 = int_to_ptr.vmem [resolvable:$true] %s51
      %57 = dma.hbm_to_vmem [thread:$0]  %s3, 512, %s52, [#allocation9], 128, 128, 8
    $region17: #{tpu_custom_call.1} parent=1 // pred_fallthru
      _
    // Predicated region
    $region18: #{tpu_custom_call.1} parent=1 // pred_check
      _
    $region19: #{tpu_custom_call.1} parent=1 // pred_check_branch
      %59 = sbr.rel (0) target = $region21
    $region20: #{tpu_custom_call.1} parent=1 // pred_region
      _
    $region21: #{tpu_custom_call.1} parent=1 // pred_fallthru
      _
    // Predicated region
    $region22: #{tpu_custom_call.1} parent=1 // pred_check
      _
    $region23: #{tpu_custom_call.1} parent=1 // pred_check_branch
      %61 = sbr.rel (0) target = $region25
    $region24: #{tpu_custom_call.1} parent=1 // pred_region
      %62 = dma.done [#allocation3], 128
    $region25: #{tpu_custom_call.1} parent=1 // pred_fallthru
      _
    // Predicated region
    $region26: #{tpu_custom_call.1} parent=1 // pred_check
      _
    $region27: #{tpu_custom_call.1} parent=1 // pred_check_branch
      %64 = sbr.rel (0) target = $region29
    $region28: #{tpu_custom_call.1} parent=1 // pred_region
      %65 = dma.done [#allocation6], 1024
    $region29: #{tpu_custom_call.1} parent=1 // pred_fallthru
      _
    // Predicated region
    $region30: #{tpu_custom_call.1} parent=1 // pred_check
      _
    $region31: #{tpu_custom_call.1} parent=1 // pred_check_branch
      %67 = sbr.rel (0) target = $region33
    $region32: #{tpu_custom_call.1} parent=1 // pred_region
      %68 = dma.done [#allocation6], 128
    $region33: #{tpu_custom_call.1} parent=1 // pred_fallthru
      _
    // Predicated region
    $region34: #{tpu_custom_call.1} parent=1 // pred_check
      _
    $region35: #{tpu_custom_call.1} parent=1 // pred_check_branch
      %70 = sbr.rel (0) target = $region37
    $region36: #{tpu_custom_call.1} parent=1 // pred_region
      %71 = dma.done [#allocation9], 512
    $region37: #{tpu_custom_call.1} parent=1 // pred_fallthru
      _
    %v72 = vld [vmem:[#allocation5] sm:$0xff]
    %v73 = vld [vmem:[#allocation5 + $0x8] sm:$0xff]
    %v74 = vld [vmem:[#allocation5 + $0x10] sm:$0xff]
    %v75 = vld [vmem:[#allocation5 + $0x18] sm:$0xff]
    %v76 = vld [vmem:[#allocation5 + $0x20] sm:$0xff]
    %v77 = vld [vmem:[#allocation5 + $0x28] sm:$0xff]
    %v78 = vld [vmem:[#allocation5 + $0x30] sm:$0xff]
    %v79 = vld [vmem:[#allocation5 + $0x38] sm:$0xff]
    %v80 = vld [vmem:[#allocation8] sm:$0xff]
    %v81 = vld [vmem:[#allocation8 + $0x8] sm:$0xff]
    %v82 = vld [vmem:[#allocation8 + $0x10] sm:$0xff]
    %v83 = vld [vmem:[#allocation8 + $0x18] sm:$0xff]
    %vm84 = vcmask 261120
    %v86 = vsel %vm84, %v72, 0
    %v89 = vsel %vm84, %v73, 0
    %v92 = vsel %vm84, %v74, 0
    %v95 = vsel %vm84, %v75, 0
    %v98 = vsel %vm84, %v76, 0
    %v101 = vsel %vm84, %v77, 0
    %v104 = vsel %vm84, %v78, 0
    %v107 = vsel %vm84, %v79, 0
    %109 = vmatprep.subr.mxu0 0.0
    %110 = vmatpush1.msra.mxu0 %v80
    %111 = vmatprep.subr.mxu0 0.0
    %112 = vmatpush1.msra.mxu0 %v81
    %113 = vmatprep.subr.mxu0 0.0
    %114 = vmatpush1.msra.mxu0 %v82
    %115 = vmatprep.subr.mxu0 0.0
    %116 = vmatpush1.msra.mxu0 %v83
    %117 = vmatprep.subr.mxu0 0.0
    %118 = vmatpush1.msra.mxu0 0.0
    %119 = vmatprep.subr.mxu0 0.0
    %120 = vmatpush1.msra.mxu0 0.0
    %121 = vmatprep.subr.mxu0 0.0
    %122 = vmatpush1.msra.mxu0 0.0
    %123 = vmatprep.subr.mxu0 0.0
    %124 = vmatpush1.msra.mxu0 0.0
    %125 = vmatprep.subr.mxu0 0.0
    %126 = vmatpush1.msra.mxu0 0.0
    %127 = vmatprep.subr.mxu0 0.0
    %128 = vmatpush1.msra.mxu0 0.0
    %129 = vmatprep.subr.mxu0 0.0
    %130 = vmatpush1.msra.mxu0 0.0
    %131 = vmatprep.subr.mxu0 0.0
    %132 = vmatpush1.msra.mxu0 0.0
    %133 = vmatprep.subr.mxu0 0.0
    %134 = vmatpush1.msra.mxu0 0.0
    %135 = vmatprep.subr.mxu0 0.0
    %136 = vmatpush1.msra.mxu0 0.0
    %137 = vmatprep.subr.mxu0 0.0
    %138 = vmatpush1.msra.mxu0 0.0
    %139 = vmatprep.subr.mxu0 0.0
    %140 = vmatpush1.msra.mxu0 0.0
    %141 = vmatprep.subr.mxu0 0.0
    %142 = vmatpush1.msra.mxu0 0.0
    %143 = vmatprep.subr.mxu0 0.0
    %144 = vmatpush1.msra.mxu0 0.0
    %145 = vmatprep.subr.mxu0 0.0
    %146 = vmatpush1.msra.mxu0 0.0
    %147 = vmatprep.subr.mxu0 0.0
    %148 = vmatpush1.msra.mxu0 0.0
    %149 = vmatprep.subr.mxu0 0.0
    %150 = vmatpush1.msra.mxu0 0.0
    %151 = vmatprep.subr.mxu0 0.0
    %152 = vmatpush1.msra.mxu0 0.0
    %153 = vmatprep.subr.mxu0 0.0
    %154 = vmatpush1.msra.mxu0 0.0
    %155 = vmatprep.subr.mxu0 0.0
    %156 = vmatpush1.msra.mxu0 0.0
    %157 = vmatprep.subr.mxu0 0.0
    %158 = vmatpush1.msra.mxu0 0.0
    %159 = vmatprep.subr.mxu0 0.0
    %160 = vmatpush1.msra.mxu0 0.0
    %161 = vmatprep.subr.mxu0 0.0
    %162 = vmatpush1.msra.mxu0 0.0
    %163 = vmatprep.subr.mxu0 0.0
    %164 = vmatpush1.msra.mxu0 0.0
    %165 = vmatprep.subr.mxu0 0.0
    %166 = vmatpush1.msra.mxu0 0.0
    %167 = vmatprep.subr.mxu0 0.0
    %168 = vmatpush1.msra.mxu0 0.0
    %169 = vmatprep.subr.mxu0 0.0
    %170 = vmatpush1.msra.mxu0 0.0
    %171 = vmatprep.subr.mxu0 0.0
    %172 = vmatpush1.msra.mxu0 0.0
    %173 = vmatprep.mubr.f32.mxu0 0.0
    %174 = vmatmul.mubr.f32.gmra.mrb[0].mxu0 %v86
    %v175 = vpop.f32.mrb[0].mxu0
    %v176 = vadd.f32 0.0, %v175
    %v177 = vpop.f32.mrb[0].mxu0
    %178 = vmatprep.mubr.f32.mxu0 0.0
    %179 = vmatmul.mubr.f32.gmra.mrb[0].mxu0 %v89
    %v180 = vpop.f32.mrb[0].mxu0
    %v181 = vadd.f32 0.0, %v180
    %v182 = vpop.f32.mrb[0].mxu0
    %183 = vmatprep.mubr.f32.mxu0 0.0
    %184 = vmatmul.mubr.f32.gmra.mrb[0].mxu0 %v92
    %v185 = vpop.f32.mrb[0].mxu0
    %v186 = vadd.f32 0.0, %v185
    %v187 = vpop.f32.mrb[0].mxu0
    %188 = vmatprep.mubr.f32.mxu0 0.0
    %189 = vmatmul.mubr.f32.gmra.mrb[0].mxu0 %v95
    %v190 = vpop.f32.mrb[0].mxu0
    %v191 = vadd.f32 0.0, %v190
    %v192 = vpop.f32.mrb[0].mxu0
    %193 = vmatprep.mubr.f32.mxu0 0.0
    %194 = vmatmul.mubr.f32.gmra.mrb[0].mxu0 %v98
    %v195 = vpop.f32.mrb[0].mxu0
    %v196 = vadd.f32 0.0, %v195
    %v197 = vpop.f32.mrb[0].mxu0
    %198 = vmatprep.mubr.f32.mxu0 0.0
    %199 = vmatmul.mubr.f32.gmra.mrb[0].mxu0 %v101
    %v200 = vpop.f32.mrb[0].mxu0
    %v201 = vadd.f32 0.0, %v200
    %v202 = vpop.f32.mrb[0].mxu0
    %203 = vmatprep.mubr.f32.mxu0 0.0
    %204 = vmatmul.mubr.f32.gmra.mrb[0].mxu0 %v104
    %v205 = vpop.f32.mrb[0].mxu0
    %v206 = vadd.f32 0.0, %v205
    %v207 = vpop.f32.mrb[0].mxu0
    %208 = vmatprep.mubr.f32.mxu0 0.0
    %209 = vmatmul.mubr.f32.gmra.mrb[0].mxu0 %v107
    %v210 = vpop.f32.mrb[0].mxu0
    %v211 = vadd.f32 0.0, %v210
    %v212 = vpop.f32.mrb[0].mxu0
    %213 = vdwg.mxu0
    %v214 = vld [vmem:[#allocation2] sm:$0xff]
    %v215 = vadd.f32 %v176, %v214
    %v216 = vadd.f32 %v181, %v214
    %v217 = vadd.f32 %v186, %v214
    %v218 = vadd.f32 %v191, %v214
    %v219 = vadd.f32 %v196, %v214
    %v220 = vadd.f32 %v201, %v214
    %v221 = vadd.f32 %v206, %v214
    %v222 = vadd.f32 %v211, %v214
    %v223 = vtanh.pop %v215
    %v224 = vtanh.pop %v216
    %v225 = vtanh.pop %v217
    %v226 = vtanh.pop %v218
    %v227 = vtanh.pop %v219
    %v228 = vtanh.pop %v220
    %v229 = vtanh.pop %v221
    %v230 = vtanh.pop %v222
    %v231 = vld [vmem:[%s4] sm:$0x1]
    %v233 = vlaneseq
    %v234 = vshrl.u32 %v233, 7
    %v235 = vsub.s32 0, %v234
    %v236 = vrot.slane %v231, %v235
    %v238 = vmul.f32 %v223, %v236
    %v239 = vmul.f32 %v224, %v236
    %v240 = vmul.f32 %v225, %v236
    %v241 = vmul.f32 %v226, %v236
    %v242 = vmul.f32 %v227, %v236
    %v243 = vmul.f32 %v228, %v236
    %v244 = vmul.f32 %v229, %v236
    %v245 = vmul.f32 %v230, %v236
    %246 = vadd.xlane.f32.xlu0 %v238
    %v247 = vpop.xlane.xlu0 %246
    %248 = vadd.xlane.f32.xlu0 %v239
    %v249 = vpop.xlane.xlu0 %248
    %250 = vadd.xlane.f32.xlu0 %v240
    %v251 = vpop.xlane.xlu0 %250
    %252 = vadd.xlane.f32.xlu0 %v241
    %v253 = vpop.xlane.xlu0 %252
    %254 = vadd.xlane.f32.xlu0 %v242
    %v255 = vpop.xlane.xlu0 %254
    %256 = vadd.xlane.f32.xlu0 %v243
    %v257 = vpop.xlane.xlu0 %256
    %258 = vadd.xlane.f32.xlu0 %v244
    %v259 = vpop.xlane.xlu0 %258
    %260 = vadd.xlane.f32.xlu0 %v245
    %v261 = vpop.xlane.xlu0 %260
    %v262 = vld [vmem:[#allocation7] sm:$0xff]
    %vm263 = vcmp.eq.s32.totalorder %v262, 0
    %v272 = vlaneseq
    %v273 = vand.u32 %v272, 127
    %v274 = vlaneseq
    %v275 = vshrl.u32 %v274, 7
    %v276 = vsub.s32 %v273, %v275
    %v277 = vrot.slane %v247, %v276
    %v278 = vlaneseq
    %v279 = vshrl.u32 %v278, 7
    %v280 = vsub.s32 %v273, %v279
    %v281 = vrot.slane %v249, %v280
    %v282 = vlaneseq
    %v283 = vshrl.u32 %v282, 7
    %v284 = vsub.s32 %v273, %v283
    %v285 = vrot.slane %v251, %v284
    %v286 = vlaneseq
    %v287 = vshrl.u32 %v286, 7
    %v288 = vsub.s32 %v273, %v287
    %v289 = vrot.slane %v253, %v288
    %v290 = vlaneseq
    %v291 = vshrl.u32 %v290, 7
    %v292 = vsub.s32 %v273, %v291
    %v293 = vrot.slane %v255, %v292
    %v294 = vlaneseq
    %v295 = vshrl.u32 %v294, 7
    %v296 = vsub.s32 %v273, %v295
    %v297 = vrot.slane %v257, %v296
    %v298 = vlaneseq
    %v299 = vshrl.u32 %v298, 7
    %v300 = vsub.s32 %v273, %v299
    %v301 = vrot.slane %v259, %v300
    %v302 = vlaneseq
    %v303 = vshrl.u32 %v302, 7
    %v304 = vsub.s32 %v273, %v303
    %v305 = vrot.slane %v261, %v304
    %vm306 = vcmask 1041409
    %v307 = vsel %vm306, %v281, %v277
    %vm308 = vcmask 1042434
    %v309 = vsel %vm308, %v285, %v307
    %vm310 = vcmask 1043459
    %v311 = vsel %vm310, %v289, %v309
    %vm312 = vcmask 1044484
    %v313 = vsel %vm312, %v293, %v311
    %vm314 = vcmask 1045509
    %v315 = vsel %vm314, %v297, %v313
    %vm316 = vcmask 1046534
    %v317 = vsel %vm316, %v301, %v315
    %vm318 = vcmask 1047559
    %v319 = vsel %vm318, %v305, %v317
    %v321 = vsel %vm263, -1e+10, %v319
    %vm322 = vcmask 64512
    %v323 = vsel %vm322, %v321, -inf
    %v324 = vrot.slane %v323, 4
    %v325 = vmax.f32 %v323, %v324
    %v326 = vrot.slane %v325, 2
    %v327 = vmax.f32 %v325, %v326
    %v328 = vrot.slane %v327, 1
    %v329 = vmax.f32 %v327, %v328
    %v330 = vsub.f32 %v321, %v329
    %v331 = vmul.f32 %v330, 1.442695
    %v332 = vpow.pop %v331
    %v333 = vsel %vm322, %v332, 0.0
    %v334 = vrot.slane %v333, 4
    %v335 = vadd.f32 %v333, %v334
    %v336 = vrot.slane %v335, 2
    %v337 = vadd.f32 %v335, %v336
    %v338 = vrot.slane %v337, 1
    %v339 = vadd.f32 %v337, %v338
    %v340 = vrcp.pop %v339
    %v341 = vmul.f32 %v332, %v340
    %342 = vst.msk [vmem:[#allocation10] sm:$0xff] %vm322, %v341
    // Predicated region
    $region38: #{tpu_custom_call.1} parent=1 // pred_check
      _
    $region39: #{tpu_custom_call.1} parent=1 // pred_check_branch
      %344 = sbr.rel (0) target = $region41
    $region40: #{tpu_custom_call.1} parent=1 // pred_region
      %s346 = ssub.s32 128, 128
      %347 = vsyncadd [#allocation4], %s346
      %s349 = sshll.u32 [#allocation10], 4
      %s350 = int_to_ptr.vmem [resolvable:$true] %s349
      %352 = dma.vmem_to_hbm [thread:$0]  %s350, 128, %s5, [#allocation4]
    $region41: #{tpu_custom_call.1} parent=1 // pred_fallthru
      _
    // Predicated region
    $region42: #{tpu_custom_call.1} parent=1 // pred_check
      _
    $region43: #{tpu_custom_call.1} parent=1 // pred_check_branch
      %354 = sbr.rel (0) target = $region45
    $region44: #{tpu_custom_call.1} parent=1 // pred_region
      %355 = dma.done [#allocation4], 128
    $region45: #{tpu_custom_call.1} parent=1 // pred_fallthru
      _
    %356 = vsyncpa [#allocation3], 1
    %357 = vsyncpa [#allocation6], 1
    %358 = vsyncpa [#allocation9], 1
    %359 = vsyncpa [#allocation4], 1

</llo_original>
